<compile_context>
chip_gen: v7x
topology: tpu7x:2x2x1
jax: 0.10.0
libtpu: 0.0.40
codegen_flags: <defaults>
</compile_context>

<pallas_src>
import functools

import jax
import jax.numpy as jnp
from jax.experimental import pallas as pl
from jax.experimental.pallas import tpu as pltpu


def _round_up(x, m):
    return (x + m - 1) // m * m


# ----------------------------- Pallas kernel ------------------------------ #
def lstm_fc_kernel(x_ref, wx_ref, wh_ref, b_ref, wfc_ref, bfc_ref,
                   out_ref, xw_scr, hs_scr, *, T, B, H):
    """Whole sequence in one kernel invocation.

    x_ref   : (T*B, E)   time-major, batch-padded embeddings (flattened)
    wx_ref  : (E, 4H)    fused input->gate weights, gate order (i, f, g, o)
    wh_ref  : (H, 4H)    fused hidden->gate weights
    b_ref   : (1, 4H)    combined bias (b_ih + b_hh), fused gate layout
    wfc_ref : (H, Vp)    final linear weight (pre-transposed, vocab padded)
    bfc_ref : (1, Vp)    final linear bias (vocab padded)
    out_ref : (T*B, Vp)  logits for all time steps (lane-dense store)
    xw_scr  : (T*B, 4H)  VMEM staging for hoisted input-gate contributions
    hs_scr  : (T*B, H)   VMEM staging for per-step hidden states
    """
    # Prologue: hoisted input contribution for ALL time steps in one matmul,
    # staged to VMEM so the serial loop only touches small aligned slices.
    xw_scr[...] = (jnp.dot(x_ref[...], wx_ref[...],
                           preferred_element_type=jnp.float32)
                   + b_ref[...])                                  # (T*B, 4H)
    wh = wh_ref[...]                                              # (H, 4H)

    def step(t, carry):
        h, c = carry
        off = pl.multiple_of(t * B, 8)                            # sublane aligned
        gates = (xw_scr[pl.ds(off, B), :]
                 + jnp.dot(h, wh, preferred_element_type=jnp.float32))  # (B, 4H)
        i = jax.nn.sigmoid(gates[:, 0:H])
        f = jax.nn.sigmoid(gates[:, H:2 * H])
        g = jnp.tanh(gates[:, 2 * H:3 * H])
        o = jax.nn.sigmoid(gates[:, 3 * H:4 * H])
        c = f * c + i * g
        h = o * jnp.tanh(c)
        hs_scr[pl.ds(off, B), :] = h
        return (h, c)

    h0 = jnp.zeros((B, H), jnp.float32)
    c0 = jnp.zeros((B, H), jnp.float32)
    jax.lax.fori_loop(0, T, step, (h0, c0))

    # Epilogue: hoisted vocab projection for ALL time steps in one matmul,
    # stored to a lane-dense (Vp multiple of 128) output slab.
    out_ref[...] = (jnp.dot(hs_scr[...], wfc_ref[...],
                            preferred_element_type=jnp.float32)
                    + bfc_ref[...]).astype(out_ref.dtype)


def lstm_fc_pallas(x_flat, wx, wh, b, wfc, bfc, *, T, B):
    """x_flat: (T*B, E) time-major flattened embeddings -> (T*B, Vp) logits."""
    TB, E = x_flat.shape
    H, G = wh.shape          # G = 4H
    Vp = wfc.shape[-1]

    kernel = functools.partial(lstm_fc_kernel, T=T, B=B, H=H)

    return pl.pallas_call(
        kernel,
        out_shape=jax.ShapeDtypeStruct((TB, Vp), jnp.float32),
        grid_spec=pltpu.PrefetchScalarGridSpec(
            num_scalar_prefetch=0,
            grid=(1,),
            in_specs=[
                pl.BlockSpec((TB, E), lambda i: (0, 0)),   # whole input resident
                pl.BlockSpec((E, G), lambda i: (0, 0)),    # fused Wx
                pl.BlockSpec((H, G), lambda i: (0, 0)),    # fused Wh
                pl.BlockSpec((1, G), lambda i: (0, 0)),    # fused bias
                pl.BlockSpec((H, Vp), lambda i: (0, 0)),   # fc weight
                pl.BlockSpec((1, Vp), lambda i: (0, 0)),   # fc bias
            ],
            out_specs=pl.BlockSpec((TB, Vp), lambda i: (0, 0)),
            scratch_shapes=[
                pltpu.VMEM((TB, G), jnp.float32),          # staged gate inputs
                pltpu.VMEM((TB, H), jnp.float32),          # staged hidden states
            ],
        ),
        compiler_params=pltpu.CompilerParams(
            dimension_semantics=("arbitrary",),
        ),
        # TODO(synk): at production scale (H=512, V=30k+) tile the vocab axis
        # of the final projection with a "parallel" grid dim and use bf16
        # weights so the resident slabs fit the v7x 64 MiB VMEM budget.
    )(x_flat, wx, wh, b, wfc, bfc)


# --------------------------- module-level wrapper -------------------------- #
def caption_generator_forward(params, features, captions):
    """Pallas-backed equivalent of CaptionGenerator.forward.

    features : (B, E) float32
    captions : (B, T) int32 token ids
    returns  : (B, T+1, V) float32 logits (batch-first, like PyTorch)
    """
    # Embedding lookup + concat features as the first "token" (glue, plain JAX).
    emb = jnp.take(params["embedding"], captions, axis=0)          # (B, T, E)
    seq = jnp.concatenate([features[:, None, :], emb], axis=1)     # (B, T+1, E)

    B, T, E = seq.shape
    V = params["wfc_t"].shape[-1]

    B_pad = _round_up(B, 8)        # sublane-dense batch
    V_pad = _round_up(V, 128)      # lane-dense output

    # Zero-pad batch, go time-major, flatten time/batch.
    seq_p = jnp.pad(seq, ((0, B_pad - B), (0, 0), (0, 0)))
    x_flat = jnp.transpose(seq_p, (1, 0, 2)).reshape(T * B_pad, E)  # (T*Bp, E)

    # Zero-pad the vocab dimension of the projection.
    wfc_p = jnp.pad(params["wfc_t"], ((0, 0), (0, V_pad - V)))
    bfc_p = jnp.pad(params["bfc"], ((0, 0), (0, V_pad - V)))

    out_flat = lstm_fc_pallas(
        x_flat, params["wx"], params["wh"], params["b"], wfc_p, bfc_p,
        T=T, B=B_pad,
    )                                                              # (T*Bp, Vp)

    out = out_flat.reshape(T, B_pad, V_pad)[:, :B, :V]             # (T, B, V)
    return jnp.transpose(out, (1, 0, 2))                           # (B, T, V)


# ------------------------------ JAX reference ------------------------------ #
def caption_generator_ref(params, features, captions):
    emb = jnp.take(params["embedding"], captions, axis=0)
    seq = jnp.concatenate([features[:, None, :], emb], axis=1)     # (B, T+1, E)
    B = seq.shape[0]
    H = params["wh"].shape[0]
    wx, wh, b = params["wx"], params["wh"], params["b"]

    def step(carry, xt):
        h, c = carry
        gates = xt @ wx + h @ wh + b                               # (B, 4H)
        i = jax.nn.sigmoid(gates[:, 0:H])
        f = jax.nn.sigmoid(gates[:, H:2 * H])
        g = jnp.tanh(gates[:, 2 * H:3 * H])
        o = jax.nn.sigmoid(gates[:, 3 * H:4 * H])
        c = f * c + i * g
        h = o * jnp.tanh(c)
        return (h, c), h

    init = (jnp.zeros((B, H), jnp.float32), jnp.zeros((B, H), jnp.float32))
    _, hs = jax.lax.scan(step, init, jnp.transpose(seq, (1, 0, 2)))  # (T+1, B, H)
    hs = jnp.transpose(hs, (1, 0, 2))                                # (B, T+1, H)
    return hs @ params["wfc_t"] + params["bfc"][0]


# --------------------------------- main ------------------------------------ #
if __name__ == "__main__":
    # Small shapes consistent with the module (vocab, embedding_dim, hidden_dim).
    vocab_size, embedding_dim, hidden_dim = 48, 32, 32
    batch, seq_len = 2, 8   # captions: (B, T); features: (B, E)

    key = jax.random.PRNGKey(0)
    keys = jax.random.split(key, 8)
    s = 0.1

    G = 4 * hidden_dim  # fused gate width, order (i, f, g, o) like PyTorch

    params = {
        # nn.Embedding(vocab_size, embedding_dim)
        "embedding": s * jax.random.normal(keys[0], (vocab_size, embedding_dim), jnp.float32),
        # nn.LSTM(embedding_dim, hidden_dim): weights stored pre-transposed and
        # gate-fused: W_ih^T -> (E, 4H), W_hh^T -> (H, 4H), b_ih+b_hh -> (1, 4H).
        "wx": s * jax.random.normal(keys[1], (embedding_dim, G), jnp.float32),
        "wh": s * jax.random.normal(keys[2], (hidden_dim, G), jnp.float32),
        "b": s * jax.random.normal(keys[3], (1, G), jnp.float32),
        # nn.Linear(hidden_dim, vocab_size): weight (V,H) stored transposed as (H,V)
        "wfc_t": s * jax.random.normal(keys[4], (hidden_dim, vocab_size), jnp.float32),
        "bfc": s * jax.random.normal(keys[5], (1, vocab_size), jnp.float32),
    }

    features = jax.random.normal(keys[6], (batch, embedding_dim), jnp.float32)
    captions = jax.random.randint(keys[7], (batch, seq_len), 0, vocab_size, jnp.int32)

    out = caption_generator_forward(params, features, captions)
    out = jax.block_until_ready(out)

    assert out.shape == (batch, seq_len + 1, vocab_size), out.shape

    ref = jax.block_until_ready(caption_generator_ref(params, features, captions))
    assert jnp.allclose(out, ref, rtol=1e-4, atol=1e-4), "mismatch vs JAX reference"

    print("KERNEL_OK")
</pallas_src>

<mosaic_0001>
module attributes {stable_mosaic.version = 11 : i64} {
  func.func @lstm_fc_kernel(%arg0: i32, %arg1: memref<72x32xf32, #tpu.memory_space<vmem>>, %arg2: memref<32x128xf32, #tpu.memory_space<vmem>>, %arg3: memref<32x128xf32, #tpu.memory_space<vmem>>, %arg4: memref<1x128xf32, #tpu.memory_space<vmem>>, %arg5: memref<32x128xf32, #tpu.memory_space<vmem>>, %arg6: memref<1x128xf32, #tpu.memory_space<vmem>>, %arg7: memref<72x128xf32, #tpu.memory_space<vmem>>, %arg8: memref<72x128xf32, #tpu.memory_space<vmem>>, %arg9: memref<72x32xf32, #tpu.memory_space<vmem>>) attributes {dimension_semantics = [#tpu.dimension_semantics<arbitrary>], iteration_bounds = array<i64: 1>, scalar_prefetch = 0 : i64, scratch_operands = 2 : i64, tpu.core_type = #tpu.core_type<tc>, window_params = [{pipeline_mode = #tpu.pipeline_mode<synchronous>, transform_indices = @transform_0, window_bounds = array<i64: 72, 32>}, {pipeline_mode = #tpu.pipeline_mode<synchronous>, transform_indices = @transform_1, window_bounds = array<i64: 32, 128>}, {pipeline_mode = #tpu.pipeline_mode<synchronous>, transform_indices = @transform_2, window_bounds = array<i64: 32, 128>}, {pipeline_mode = #tpu.pipeline_mode<synchronous>, transform_indices = @transform_3, window_bounds = array<i64: 1, 128>}, {pipeline_mode = #tpu.pipeline_mode<synchronous>, transform_indices = @transform_4, window_bounds = array<i64: 32, 128>}, {pipeline_mode = #tpu.pipeline_mode<synchronous>, transform_indices = @transform_5, window_bounds = array<i64: 1, 128>}, {pipeline_mode = #tpu.pipeline_mode<synchronous>, transform_indices = @transform_6, window_bounds = array<i64: 72, 128>}]} {
    %c0 = arith.constant 0 : index
    %c0_0 = arith.constant 0 : index
    %0 = vector.load %arg1[%c0, %c0_0] : memref<72x32xf32, #tpu.memory_space<vmem>>, vector<72x32xf32>
    %c0_1 = arith.constant 0 : index
    %c0_2 = arith.constant 0 : index
    %1 = vector.load %arg2[%c0_1, %c0_2] : memref<32x128xf32, #tpu.memory_space<vmem>>, vector<32x128xf32>
    %cst = arith.constant dense<0.000000e+00> : vector<72x128xf32>
    %2 = tpu.matmul %0, %1, %cst {dimension_numbers = #tpu.dot_dimension_numbers<[1], [0], [0], [1], [0, 0, 1, 1], [], []>} : vector<72x32xf32>, vector<32x128xf32>, vector<72x128xf32> -> vector<72x128xf32>
    %c0_3 = arith.constant 0 : index
    %c0_4 = arith.constant 0 : index
    %3 = vector.load %arg4[%c0_3, %c0_4] : memref<1x128xf32, #tpu.memory_space<vmem>>, vector<1x128xf32>
    %4 = vector.broadcast %3 : vector<1x128xf32> to vector<72x128xf32>
    %5 = arith.addf %2, %4 : vector<72x128xf32>
    %c0_5 = arith.constant 0 : index
    %c0_6 = arith.constant 0 : index
    %6 = vector.load %arg8[%c0_5, %c0_6] : memref<72x128xf32, #tpu.memory_space<vmem>>, vector<72x128xf32>
    tpu.vector_store %arg8[%c0_5, %c0_6], %5 {strides = array<i32>} : memref<72x128xf32, #tpu.memory_space<vmem>>, vector<72x128xf32>,
    %c0_7 = arith.constant 0 : index
    %c0_8 = arith.constant 0 : index
    %7 = vector.load %arg3[%c0_7, %c0_8] : memref<32x128xf32, #tpu.memory_space<vmem>>, vector<32x128xf32>
    %cst_9 = arith.constant 0.000000e+00 : f32
    %8 = vector.broadcast %cst_9 : f32 to vector<8x32xf32>
    %cst_10 = arith.constant 0.000000e+00 : f32
    %9 = vector.broadcast %cst_10 : f32 to vector<8x32xf32>
    %c0_i32 = arith.constant 0 : i32
    %c9_i32 = arith.constant 9 : i32
    %10 = arith.addi %c0_i32, %c9_i32 : i32
    %c1_i32 = arith.constant 1 : i32
    %11:2 = scf.for %arg10 = %c0_i32 to %10 step %c1_i32 iter_args(%arg11 = %8, %arg12 = %9) -> (vector<8x32xf32>, vector<8x32xf32>)  : i32 {
      %c8_i32 = arith.constant 8 : i32
      %19 = arith.muli %arg10, %c8_i32 : i32
      %20 = tpu.assume_multiple %19, 8 : i32
      %21 = arith.index_cast %20 : i32 to index
      %c0_21 = arith.constant 0 : index
      %22 = vector.load %arg8[%21, %c0_21] : memref<72x128xf32, #tpu.memory_space<vmem>>, vector<8x128xf32>
      %cst_22 = arith.constant dense<0.000000e+00> : vector<8x128xf32>
      %23 = tpu.matmul %arg11, %7, %cst_22 {dimension_numbers = #tpu.dot_dimension_numbers<[1], [0], [0], [1], [0, 0, 1, 1], [], []>} : vector<8x32xf32>, vector<32x128xf32>, vector<8x128xf32> -> vector<8x128xf32>
      %24 = arith.addf %22, %23 : vector<8x128xf32>
      %25 = vector.extract_strided_slice %24 {offsets = [0, 0], sizes = [8, 32], strides = [1, 1]} : vector<8x128xf32> to vector<8x32xf32>
      %26 = arith.negf %25 : vector<8x32xf32>
      %27 = math.exp %26 : vector<8x32xf32>
      %cst_23 = arith.constant 1.000000e+00 : f32
      %28 = vector.broadcast %cst_23 : f32 to vector<8x32xf32>
      %29 = arith.addf %28, %27 : vector<8x32xf32>
      %30 = arith.divf %28, %29 : vector<8x32xf32>
      %31 = vector.extract_strided_slice %24 {offsets = [0, 32], sizes = [8, 32], strides = [1, 1]} : vector<8x128xf32> to vector<8x32xf32>
      %32 = arith.negf %31 : vector<8x32xf32>
      %33 = math.exp %32 : vector<8x32xf32>
      %cst_24 = arith.constant 1.000000e+00 : f32
      %34 = vector.broadcast %cst_24 : f32 to vector<8x32xf32>
      %35 = arith.addf %34, %33 : vector<8x32xf32>
      %36 = arith.divf %34, %35 : vector<8x32xf32>
      %37 = vector.extract_strided_slice %24 {offsets = [0, 64], sizes = [8, 32], strides = [1, 1]} : vector<8x128xf32> to vector<8x32xf32>
      %38 = math.tanh %37 : vector<8x32xf32>
      %39 = vector.extract_strided_slice %24 {offsets = [0, 96], sizes = [8, 32], strides = [1, 1]} : vector<8x128xf32> to vector<8x32xf32>
      %40 = arith.negf %39 : vector<8x32xf32>
      %41 = math.exp %40 : vector<8x32xf32>
      %cst_25 = arith.constant 1.000000e+00 : f32
      %42 = vector.broadcast %cst_25 : f32 to vector<8x32xf32>
      %43 = arith.addf %42, %41 : vector<8x32xf32>
      %44 = arith.divf %42, %43 : vector<8x32xf32>
      %45 = arith.mulf %36, %arg12 : vector<8x32xf32>
      %46 = arith.mulf %30, %38 : vector<8x32xf32>
      %47 = arith.addf %45, %46 : vector<8x32xf32>
      %48 = math.tanh %47 : vector<8x32xf32>
      %49 = arith.mulf %44, %48 : vector<8x32xf32>
      %50 = arith.index_cast %20 : i32 to index
      %c0_26 = arith.constant 0 : index
      %51 = vector.load %arg9[%50, %c0_26] : memref<72x32xf32, #tpu.memory_space<vmem>>, vector<8x32xf32>
      tpu.vector_store %arg9[%50, %c0_26], %49 {strides = array<i32>} : memref<72x32xf32, #tpu.memory_space<vmem>>, vector<8x32xf32>,
      scf.yield %49, %47 : vector<8x32xf32>, vector<8x32xf32>
    }
    %c9_i32_11 = arith.constant 9 : i32
    %c0_12 = arith.constant 0 : index
    %c0_13 = arith.constant 0 : index
    %12 = vector.load %arg9[%c0_12, %c0_13] : memref<72x32xf32, #tpu.memory_space<vmem>>, vector<72x32xf32>
    %c0_14 = arith.constant 0 : index
    %c0_15 = arith.constant 0 : index
    %13 = vector.load %arg5[%c0_14, %c0_15] : memref<32x128xf32, #tpu.memory_space<vmem>>, vector<32x128xf32>
    %cst_16 = arith.constant dense<0.000000e+00> : vector<72x128xf32>
    %14 = tpu.matmul %12, %13, %cst_16 {dimension_numbers = #tpu.dot_dimension_numbers<[1], [0], [0], [1], [0, 0, 1, 1], [], []>} : vector<72x32xf32>, vector<32x128xf32>, vector<72x128xf32> -> vector<72x128xf32>
    %c0_17 = arith.constant 0 : index
    %c0_18 = arith.constant 0 : index
    %15 = vector.load %arg6[%c0_17, %c0_18] : memref<1x128xf32, #tpu.memory_space<vmem>>, vector<1x128xf32>
    %16 = vector.broadcast %15 : vector<1x128xf32> to vector<72x128xf32>
    %17 = arith.addf %14, %16 : vector<72x128xf32>
    %c0_19 = arith.constant 0 : index
    %c0_20 = arith.constant 0 : index
    %18 = vector.load %arg7[%c0_19, %c0_20] : memref<72x128xf32, #tpu.memory_space<vmem>>, vector<72x128xf32>
    tpu.vector_store %arg7[%c0_19, %c0_20], %17 {strides = array<i32>} : memref<72x128xf32, #tpu.memory_space<vmem>>, vector<72x128xf32>,
    return
  }
  func.func @transform_0(%arg0: i32) -> (i32, i32) {
    %c0_i32 = arith.constant 0 : i32
    %c0_i32_0 = arith.constant 0 : i32
    %c0_i32_1 = arith.constant 0 : i32
    return %c0_i32, %c0_i32_0 : i32, i32
  }
  func.func @transform_1(%arg0: i32) -> (i32, i32) {
    %c0_i32 = arith.constant 0 : i32
    %c0_i32_0 = arith.constant 0 : i32
    %c0_i32_1 = arith.constant 0 : i32
    return %c0_i32, %c0_i32_0 : i32, i32
  }
  func.func @transform_2(%arg0: i32) -> (i32, i32) {
    %c0_i32 = arith.constant 0 : i32
    %c0_i32_0 = arith.constant 0 : i32
    %c0_i32_1 = arith.constant 0 : i32
    return %c0_i32, %c0_i32_0 : i32, i32
  }
  func.func @transform_3(%arg0: i32) -> (i32, i32) {
    %c0_i32 = arith.constant 0 : i32
    %c0_i32_0 = arith.constant 0 : i32
    %c0_i32_1 = arith.constant 0 : i32
    return %c0_i32, %c0_i32_0 : i32, i32
  }
  func.func @transform_4(%arg0: i32) -> (i32, i32) {
    %c0_i32 = arith.constant 0 : i32
    %c0_i32_0 = arith.constant 0 : i32
    %c0_i32_1 = arith.constant 0 : i32
    return %c0_i32, %c0_i32_0 : i32, i32
  }
  func.func @transform_5(%arg0: i32) -> (i32, i32) {
    %c0_i32 = arith.constant 0 : i32
    %c0_i32_0 = arith.constant 0 : i32
    %c0_i32_1 = arith.constant 0 : i32
    return %c0_i32, %c0_i32_0 : i32, i32
  }
  func.func @transform_6(%arg0: i32) -> (i32, i32) {
    %c0_i32 = arith.constant 0 : i32
    %c0_i32_0 = arith.constant 0 : i32
    %c0_i32_1 = arith.constant 0 : i32
    return %c0_i32, %c0_i32_0 : i32, i32
  }
}

</mosaic_0001>

<llo_original>
// kernel: tpu_custom_call.1
$region0: #{tpu_custom_call.1}
  #allocation0 [shape = 'u32[]', space=smem, size = 0x4, offset = 0x4, fixed_abs, tag = 'smem constant byte address 0x4 - core index']
  #allocation1 [shape = 'u32[144,128]{1,0:T(1,128)}', space=vmem, size = 0x12000, scoped, tag = 'internal scratch']
  #allocation2 [shape = 'f32[72,128]{1,0:T(8,128)}', space=vmem, size = 0x9000, scoped, tag = 'scratch operand']
  #allocation3 [shape = 'f32[72,32]{1,0:T(8,128)}', space=vmem, size = 0x9000, scoped, tag = 'scratch operand']
  %s0 = inlined_call_operand.vmem [shape: f32[72,32], index: 0, kind: input, shape index: {}]
  %s1 = inlined_call_operand.vmem [shape: f32[32,128], index: 1, kind: input, shape index: {}]
  %s2 = inlined_call_operand.vmem [shape: f32[32,128], index: 2, kind: input, shape index: {}]
  %s3 = inlined_call_operand.vmem [shape: f32[1,128], index: 3, kind: input, shape index: {}]
  %s4 = inlined_call_operand.vmem [shape: f32[32,128], index: 4, kind: input, shape index: {}]
  %s5 = inlined_call_operand.vmem [shape: f32[1,128], index: 5, kind: input, shape index: {}]
  %s6 = inlined_call_operand.hbm [shape: f32[72,128], index: 6, kind: output, shape index: {}]
  %s7 = sld [smem:[#allocation0]]
  $region41: #{tpu_custom_call.1} parent=0
    _
  %s9 = ssub.s32 1, %s7
  %s10 = scalar_select 0, %s9, %s7
  $region1: #{tpu_custom_call.1} parent=0
    #allocation4 [shape = 'u8[36864]{0}', space=vmem, size = 0x9000, scoped, tag = 'output window, operand 0, single buffered']
    #allocation5 [shape = 's32[1]{0}', space=sflag, size = 0x4, scoped, tag = 'scoped memory for tpu_custom_call.1']
    %11 = vsyncpa [#allocation5], 0
    // Predicated region
    $region2: #{tpu_custom_call.1} parent=1 // pred_check
      _
    $region3: #{tpu_custom_call.1} parent=1 // pred_check_branch
      %13 = sbr.rel (0) target = $region5
    $region4: #{tpu_custom_call.1} parent=1 // pred_region
      _
    $region5: #{tpu_custom_call.1} parent=1 // pred_fallthru
      _
    // Predicated region
    $region6: #{tpu_custom_call.1} parent=1 // pred_check
      _
    $region7: #{tpu_custom_call.1} parent=1 // pred_check_branch
      %15 = sbr.rel (0) target = $region9
    $region8: #{tpu_custom_call.1} parent=1 // pred_region
      _
    $region9: #{tpu_custom_call.1} parent=1 // pred_fallthru
      _
    // Predicated region
    $region10: #{tpu_custom_call.1} parent=1 // pred_check
      _
    $region11: #{tpu_custom_call.1} parent=1 // pred_check_branch
      %17 = sbr.rel (0) target = $region13
    $region12: #{tpu_custom_call.1} parent=1 // pred_region
      _
    $region13: #{tpu_custom_call.1} parent=1 // pred_fallthru
      _
    // Predicated region
    $region14: #{tpu_custom_call.1} parent=1 // pred_check
      _
    $region15: #{tpu_custom_call.1} parent=1 // pred_check_branch
      %19 = sbr.rel (0) target = $region17
    $region16: #{tpu_custom_call.1} parent=1 // pred_region
      _
    $region17: #{tpu_custom_call.1} parent=1 // pred_fallthru
      _
    // Predicated region
    $region18: #{tpu_custom_call.1} parent=1 // pred_check
      _
    $region19: #{tpu_custom_call.1} parent=1 // pred_check_branch
      %21 = sbr.rel (0) target = $region21
    $region20: #{tpu_custom_call.1} parent=1 // pred_region
      _
    $region21: #{tpu_custom_call.1} parent=1 // pred_fallthru
      _
    // Predicated region
    $region22: #{tpu_custom_call.1} parent=1 // pred_check
      _
    $region23: #{tpu_custom_call.1} parent=1 // pred_check_branch
      %23 = sbr.rel (0) target = $region25
    $region24: #{tpu_custom_call.1} parent=1 // pred_region
      _
    $region25: #{tpu_custom_call.1} parent=1 // pred_fallthru
      _
    %v24 = vld [vmem:[%s0] sm:$0xff]
    %v25 = vld [vmem:[%s0 + $0x8] sm:$0xff]
    %v26 = vld [vmem:[%s0 + $0x10] sm:$0xff]
    %v27 = vld [vmem:[%s0 + $0x18] sm:$0xff]
    %v28 = vld [vmem:[%s0 + $0x20] sm:$0xff]
    %v29 = vld [vmem:[%s0 + $0x28] sm:$0xff]
    %v30 = vld [vmem:[%s0 + $0x30] sm:$0xff]
    %v31 = vld [vmem:[%s0 + $0x38] sm:$0xff]
    %v32 = vld [vmem:[%s0 + $0x40] sm:$0xff]
    %v33 = vld [vmem:[%s1] sm:$0xff]
    %v34 = vld [vmem:[%s1 + $0x8] sm:$0xff]
    %v35 = vld [vmem:[%s1 + $0x10] sm:$0xff]
    %v36 = vld [vmem:[%s1 + $0x18] sm:$0xff]
    %v37 = vld [vmem:[%s3] sm:$0x1]
    %v39 = vlaneseq
    %v40 = vshrl.u32 %v39, 7
    %v41 = vsub.s32 0, %v40
    %v42 = vrot.slane %v37, %v41
    %vm44 = vcmask 261120
    %v46 = vsel %vm44, %v24, 0
    %v49 = vsel %vm44, %v25, 0
    %v52 = vsel %vm44, %v26, 0
    %v55 = vsel %vm44, %v27, 0
    %v58 = vsel %vm44, %v28, 0
    %v61 = vsel %vm44, %v29, 0
    %v64 = vsel %vm44, %v30, 0
    %v67 = vsel %vm44, %v31, 0
    %v70 = vsel %vm44, %v32, 0
    %72 = vmatprep.subr.mxu0 0.0
    %73 = vmatpush1.msra.mxu0 %v33
    %74 = vmatprep.subr.mxu0 0.0
    %75 = vmatpush1.msra.mxu0 %v34
    %76 = vmatprep.subr.mxu0 0.0
    %77 = vmatpush1.msra.mxu0 %v35
    %78 = vmatprep.subr.mxu0 0.0
    %79 = vmatpush1.msra.mxu0 %v36
    %80 = vmatprep.subr.mxu0 0.0
    %81 = vmatpush1.msra.mxu0 0.0
    %82 = vmatprep.subr.mxu0 0.0
    %83 = vmatpush1.msra.mxu0 0.0
    %84 = vmatprep.subr.mxu0 0.0
    %85 = vmatpush1.msra.mxu0 0.0
    %86 = vmatprep.subr.mxu0 0.0
    %87 = vmatpush1.msra.mxu0 0.0
    %88 = vmatprep.subr.mxu0 0.0
    %89 = vmatpush1.msra.mxu0 0.0
    %90 = vmatprep.subr.mxu0 0.0
    %91 = vmatpush1.msra.mxu0 0.0
    %92 = vmatprep.subr.mxu0 0.0
    %93 = vmatpush1.msra.mxu0 0.0
    %94 = vmatprep.subr.mxu0 0.0
    %95 = vmatpush1.msra.mxu0 0.0
    %96 = vmatprep.subr.mxu0 0.0
    %97 = vmatpush1.msra.mxu0 0.0
    %98 = vmatprep.subr.mxu0 0.0
    %99 = vmatpush1.msra.mxu0 0.0
    %100 = vmatprep.subr.mxu0 0.0
    %101 = vmatpush1.msra.mxu0 0.0
    %102 = vmatprep.subr.mxu0 0.0
    %103 = vmatpush1.msra.mxu0 0.0
    %104 = vmatprep.subr.mxu0 0.0
    %105 = vmatpush1.msra.mxu0 0.0
    %106 = vmatprep.subr.mxu0 0.0
    %107 = vmatpush1.msra.mxu0 0.0
    %108 = vmatprep.subr.mxu0 0.0
    %109 = vmatpush1.msra.mxu0 0.0
    %110 = vmatprep.subr.mxu0 0.0
    %111 = vmatpush1.msra.mxu0 0.0
    %112 = vmatprep.subr.mxu0 0.0
    %113 = vmatpush1.msra.mxu0 0.0
    %114 = vmatprep.subr.mxu0 0.0
    %115 = vmatpush1.msra.mxu0 0.0
    %116 = vmatprep.subr.mxu0 0.0
    %117 = vmatpush1.msra.mxu0 0.0
    %118 = vmatprep.subr.mxu0 0.0
    %119 = vmatpush1.msra.mxu0 0.0
    %120 = vmatprep.subr.mxu0 0.0
    %121 = vmatpush1.msra.mxu0 0.0
    %122 = vmatprep.subr.mxu0 0.0
    %123 = vmatpush1.msra.mxu0 0.0
    %124 = vmatprep.subr.mxu0 0.0
    %125 = vmatpush1.msra.mxu0 0.0
    %126 = vmatprep.subr.mxu0 0.0
    %127 = vmatpush1.msra.mxu0 0.0
    %128 = vmatprep.subr.mxu0 0.0
    %129 = vmatpush1.msra.mxu0 0.0
    %130 = vmatprep.subr.mxu0 0.0
    %131 = vmatpush1.msra.mxu0 0.0
    %132 = vmatprep.subr.mxu0 0.0
    %133 = vmatpush1.msra.mxu0 0.0
    %134 = vmatprep.subr.mxu0 0.0
    %135 = vmatpush1.msra.mxu0 0.0
    %136 = vmatprep.mubr.f32.mxu0 0.0
    %137 = vmatmul.mubr.f32.gmra.mrb[0].mxu0 %v46
    %v138 = vpop.f32.mrb[0].mxu0
    %v139 = vadd.f32 %v42, %v138
    %v140 = vpop.f32.mrb[0].mxu0
    %141 = vmatprep.mubr.f32.mxu0 0.0
    %142 = vmatmul.mubr.f32.gmra.mrb[0].mxu0 %v49
    %v143 = vpop.f32.mrb[0].mxu0
    %v144 = vadd.f32 %v42, %v143
    %v145 = vpop.f32.mrb[0].mxu0
    %146 = vmatprep.mubr.f32.mxu0 0.0
    %147 = vmatmul.mubr.f32.gmra.mrb[0].mxu0 %v52
    %v148 = vpop.f32.mrb[0].mxu0
    %v149 = vadd.f32 %v42, %v148
    %v150 = vpop.f32.mrb[0].mxu0
    %151 = vmatprep.mubr.f32.mxu0 0.0
    %152 = vmatmul.mubr.f32.gmra.mrb[0].mxu0 %v55
    %v153 = vpop.f32.mrb[0].mxu0
    %v154 = vadd.f32 %v42, %v153
    %v155 = vpop.f32.mrb[0].mxu0
    %156 = vmatprep.mubr.f32.mxu0 0.0
    %157 = vmatmul.mubr.f32.gmra.mrb[0].mxu0 %v58
    %v158 = vpop.f32.mrb[0].mxu0
    %v159 = vadd.f32 %v42, %v158
    %v160 = vpop.f32.mrb[0].mxu0
    %161 = vmatprep.mubr.f32.mxu0 0.0
    %162 = vmatmul.mubr.f32.gmra.mrb[0].mxu0 %v61
    %v163 = vpop.f32.mrb[0].mxu0
    %v164 = vadd.f32 %v42, %v163
    %v165 = vpop.f32.mrb[0].mxu0
    %166 = vmatprep.mubr.f32.mxu0 0.0
    %167 = vmatmul.mubr.f32.gmra.mrb[0].mxu0 %v64
    %v168 = vpop.f32.mrb[0].mxu0
    %v169 = vadd.f32 %v42, %v168
    %v170 = vpop.f32.mrb[0].mxu0
    %171 = vmatprep.mubr.f32.mxu0 0.0
    %172 = vmatmul.mubr.f32.gmra.mrb[0].mxu0 %v67
    %v173 = vpop.f32.mrb[0].mxu0
    %v174 = vadd.f32 %v42, %v173
    %v175 = vpop.f32.mrb[0].mxu0
    %176 = vmatprep.mubr.f32.mxu0 0.0
    %177 = vmatmul.mubr.f32.gmra.mrb[0].mxu0 %v70
    %v178 = vpop.f32.mrb[0].mxu0
    %v179 = vadd.f32 %v42, %v178
    %v180 = vpop.f32.mrb[0].mxu0
    %181 = vdwg.mxu0
    %182 = vst [vmem:[#allocation2] sm:$0xff] %v139
    %183 = vst [vmem:[#allocation2 + $0x8] sm:$0xff] %v144
    %184 = vst [vmem:[#allocation2 + $0x10] sm:$0xff] %v149
    %185 = vst [vmem:[#allocation2 + $0x18] sm:$0xff] %v154
    %186 = vst [vmem:[#allocation2 + $0x20] sm:$0xff] %v159
    %187 = vst [vmem:[#allocation2 + $0x28] sm:$0xff] %v164
    %188 = vst [vmem:[#allocation2 + $0x30] sm:$0xff] %v169
    %189 = vst [vmem:[#allocation2 + $0x38] sm:$0xff] %v174
    %190 = vst [vmem:[#allocation2 + $0x40] sm:$0xff] %v179
    %v191 = vld [vmem:[%s2] sm:$0xff]
    %v192 = vld [vmem:[%s2 + $0x8] sm:$0xff]
    %v193 = vld [vmem:[%s2 + $0x10] sm:$0xff]
    %v194 = vld [vmem:[%s2 + $0x18] sm:$0xff]
    loop: start=0, step=1, limit=9
    $region26: #{tpu_custom_call.1} parent=1 // loop_pre_header
      _
    $region27: #{tpu_custom_call.1} parent=1 // loop_header
      %s196 = sphi 0, %s200
      %p197 = scmp.ge.s32.totalorder %s196, 9
      %v201 = vphi 0.0, %v305
      %v202 = vphi 0.0, %v299
    $region28: #{tpu_custom_call.1} parent=1 // loop_header_branch
      %199 = sbr.rel (%p197) target = $region32
    $region29: #{tpu_custom_call.1} parent=1 // loop_body
      %s203 = smul.u32 %s196, 8
      %s204 = scalar_lea.vmem [#allocation2], %s203
      %v205 = vld [vmem:[%s204] sm:$0xff]
      %207 = vrot.lane.b32.xlu0 %v201, 32
      %v208 = vpop.permute.xlu0 %207
      %v209 = vsel %vm44, %v208, 0
      %211 = vmatprep.subr.mxu0 0.0
      %212 = vmatpush1.msra.mxu0 %v191
      %213 = vmatprep.subr.mxu0 0.0
      %214 = vmatpush1.msra.mxu0 %v192
      %215 = vmatprep.subr.mxu0 0.0
      %216 = vmatpush1.msra.mxu0 %v193
      %217 = vmatprep.subr.mxu0 0.0
      %218 = vmatpush1.msra.mxu0 %v194
      %219 = vmatprep.subr.mxu0 0.0
      %220 = vmatpush1.msra.mxu0 0.0
      %221 = vmatprep.subr.mxu0 0.0
      %222 = vmatpush1.msra.mxu0 0.0
      %223 = vmatprep.subr.mxu0 0.0
      %224 = vmatpush1.msra.mxu0 0.0
      %225 = vmatprep.subr.mxu0 0.0
      %226 = vmatpush1.msra.mxu0 0.0
      %227 = vmatprep.subr.mxu0 0.0
      %228 = vmatpush1.msra.mxu0 0.0
      %229 = vmatprep.subr.mxu0 0.0
      %230 = vmatpush1.msra.mxu0 0.0
      %231 = vmatprep.subr.mxu0 0.0
      %232 = vmatpush1.msra.mxu0 0.0
      %233 = vmatprep.subr.mxu0 0.0
      %234 = vmatpush1.msra.mxu0 0.0
      %235 = vmatprep.subr.mxu0 0.0
      %236 = vmatpush1.msra.mxu0 0.0
      %237 = vmatprep.subr.mxu0 0.0
      %238 = vmatpush1.msra.mxu0 0.0
      %239 = vmatprep.subr.mxu0 0.0
      %240 = vmatpush1.msra.mxu0 0.0
      %241 = vmatprep.subr.mxu0 0.0
      %242 = vmatpush1.msra.mxu0 0.0
      %243 = vmatprep.subr.mxu0 0.0
      %244 = vmatpush1.msra.mxu0 0.0
      %245 = vmatprep.subr.mxu0 0.0
      %246 = vmatpush1.msra.mxu0 0.0
      %247 = vmatprep.subr.mxu0 0.0
      %248 = vmatpush1.msra.mxu0 0.0
      %249 = vmatprep.subr.mxu0 0.0
      %250 = vmatpush1.msra.mxu0 0.0
      %251 = vmatprep.subr.mxu0 0.0
      %252 = vmatpush1.msra.mxu0 0.0
      %253 = vmatprep.subr.mxu0 0.0
      %254 = vmatpush1.msra.mxu0 0.0
      %255 = vmatprep.subr.mxu0 0.0
      %256 = vmatpush1.msra.mxu0 0.0
      %257 = vmatprep.subr.mxu0 0.0
      %258 = vmatpush1.msra.mxu0 0.0
      %259 = vmatprep.subr.mxu0 0.0
      %260 = vmatpush1.msra.mxu0 0.0
      %261 = vmatprep.subr.mxu0 0.0
      %262 = vmatpush1.msra.mxu0 0.0
      %263 = vmatprep.subr.mxu0 0.0
      %264 = vmatpush1.msra.mxu0 0.0
      %265 = vmatprep.subr.mxu0 0.0
      %266 = vmatpush1.msra.mxu0 0.0
      %267 = vmatprep.subr.mxu0 0.0
      %268 = vmatpush1.msra.mxu0 0.0
      %269 = vmatprep.subr.mxu0 0.0
      %270 = vmatpush1.msra.mxu0 0.0
      %271 = vmatprep.subr.mxu0 0.0
      %272 = vmatpush1.msra.mxu0 0.0
      %273 = vmatprep.subr.mxu0 0.0
      %274 = vmatpush1.msra.mxu0 0.0
      %275 = vmatprep.mubr.f32.mxu0 0.0
      %276 = vmatmul.mubr.f32.gmra.mrb[0].mxu0 %v209
      %v277 = vpop.f32.mrb[0].mxu0
      %v278 = vadd.f32 0.0, %v277
      %v279 = vpop.f32.mrb[0].mxu0
      %280 = vdwg.mxu0
      %v281 = vadd.f32 %v205, %v278
      %v282 = vxor.u32 %v281, 2147483648
      %v283 = vmul.f32 %v282, 1.442695
      %v284 = vpow.pop %v283
      %v285 = vadd.f32 %v284, 1.0
      %v286 = vrcp.pop %v285
      %v287 = vmul.f32 1.0, %v286
      %v288 = vtanh.pop %v281
      %v289 = vmul.f32 %v287, %v202
      %291 = vrot.lane.b32.xlu0 %v288, 64
      %v292 = vpop.permute.xlu0 %291
      %v294 = vmul.f32 %v287, %v292
      %296 = vrot.lane.b32.xlu0 %v294, 32
      %v297 = vpop.permute.xlu0 %296
      %v299 = vadd.f32 %v289, %v297
      %v300 = vtanh.pop %v299
      %302 = vrot.lane.b32.xlu0 %v300, 64
      %v303 = vpop.permute.xlu0 %302
      %v305 = vmul.f32 %v287, %v303
      %307 = vrot.lane.b32.xlu0 %v305, 32
      %v308 = vpop.permute.xlu0 %307
      %s310 = scalar_lea.vmem [#allocation3], %s203
      %311 = vst.msk [vmem:[%s310] sm:$0xff] %vm44, %v308
    $region30: #{tpu_custom_call.1} parent=1 // loop_footer
      %s200 = sadd.s32 1, %s196
    $region31: #{tpu_custom_call.1} parent=1 // loop_footer_branch
      %195 = sbr.rel target = $region27
    $region32: #{tpu_custom_call.1} parent=1 // loop_exit
      _
    %v312 = vld [vmem:[#allocation3] sm:$0xff]
    %v313 = vld [vmem:[#allocation3 + $0x8] sm:$0xff]
    %v314 = vld [vmem:[#allocation3 + $0x10] sm:$0xff]
    %v315 = vld [vmem:[#allocation3 + $0x18] sm:$0xff]
    %v316 = vld [vmem:[#allocation3 + $0x20] sm:$0xff]
    %v317 = vld [vmem:[#allocation3 + $0x28] sm:$0xff]
    %v318 = vld [vmem:[#allocation3 + $0x30] sm:$0xff]
    %v319 = vld [vmem:[#allocation3 + $0x38] sm:$0xff]
    %v320 = vld [vmem:[#allocation3 + $0x40] sm:$0xff]
    %v321 = vld [vmem:[%s4] sm:$0xff]
    %v322 = vld [vmem:[%s4 + $0x8] sm:$0xff]
    %v323 = vld [vmem:[%s4 + $0x10] sm:$0xff]
    %v324 = vld [vmem:[%s4 + $0x18] sm:$0xff]
    %v325 = vld [vmem:[%s5] sm:$0x1]
    %v327 = vlaneseq
    %v328 = vshrl.u32 %v327, 7
    %v329 = vsub.s32 0, %v328
    %v330 = vrot.slane %v325, %v329
    %v333 = vsel %vm44, %v312, 0
    %v336 = vsel %vm44, %v313, 0
    %v339 = vsel %vm44, %v314, 0
    %v342 = vsel %vm44, %v315, 0
    %v345 = vsel %vm44, %v316, 0
    %v348 = vsel %vm44, %v317, 0
    %v351 = vsel %vm44, %v318, 0
    %v354 = vsel %vm44, %v319, 0
    %v357 = vsel %vm44, %v320, 0
    %359 = vmatprep.subr.mxu0 0.0
    %360 = vmatpush1.msra.mxu0 %v321
    %361 = vmatprep.subr.mxu0 0.0
    %362 = vmatpush1.msra.mxu0 %v322
    %363 = vmatprep.subr.mxu0 0.0
    %364 = vmatpush1.msra.mxu0 %v323
    %365 = vmatprep.subr.mxu0 0.0
    %366 = vmatpush1.msra.mxu0 %v324
    %367 = vmatprep.subr.mxu0 0.0
    %368 = vmatpush1.msra.mxu0 0.0
    %369 = vmatprep.subr.mxu0 0.0
    %370 = vmatpush1.msra.mxu0 0.0
    %371 = vmatprep.subr.mxu0 0.0
    %372 = vmatpush1.msra.mxu0 0.0
    %373 = vmatprep.subr.mxu0 0.0
    %374 = vmatpush1.msra.mxu0 0.0
    %375 = vmatprep.subr.mxu0 0.0
    %376 = vmatpush1.msra.mxu0 0.0
    %377 = vmatprep.subr.mxu0 0.0
    %378 = vmatpush1.msra.mxu0 0.0
    %379 = vmatprep.subr.mxu0 0.0
    %380 = vmatpush1.msra.mxu0 0.0
    %381 = vmatprep.subr.mxu0 0.0
    %382 = vmatpush1.msra.mxu0 0.0
    %383 = vmatprep.subr.mxu0 0.0
    %384 = vmatpush1.msra.mxu0 0.0
    %385 = vmatprep.subr.mxu0 0.0
    %386 = vmatpush1.msra.mxu0 0.0
    %387 = vmatprep.subr.mxu0 0.0
    %388 = vmatpush1.msra.mxu0 0.0
    %389 = vmatprep.subr.mxu0 0.0
    %390 = vmatpush1.msra.mxu0 0.0
    %391 = vmatprep.subr.mxu0 0.0
    %392 = vmatpush1.msra.mxu0 0.0
    %393 = vmatprep.subr.mxu0 0.0
    %394 = vmatpush1.msra.mxu0 0.0
    %395 = vmatprep.subr.mxu0 0.0
    %396 = vmatpush1.msra.mxu0 0.0
    %397 = vmatprep.subr.mxu0 0.0
    %398 = vmatpush1.msra.mxu0 0.0
    %399 = vmatprep.subr.mxu0 0.0
    %400 = vmatpush1.msra.mxu0 0.0
    %401 = vmatprep.subr.mxu0 0.0
    %402 = vmatpush1.msra.mxu0 0.0
    %403 = vmatprep.subr.mxu0 0.0
    %404 = vmatpush1.msra.mxu0 0.0
    %405 = vmatprep.subr.mxu0 0.0
    %406 = vmatpush1.msra.mxu0 0.0
    %407 = vmatprep.subr.mxu0 0.0
    %408 = vmatpush1.msra.mxu0 0.0
    %409 = vmatprep.subr.mxu0 0.0
    %410 = vmatpush1.msra.mxu0 0.0
    %411 = vmatprep.subr.mxu0 0.0
    %412 = vmatpush1.msra.mxu0 0.0
    %413 = vmatprep.subr.mxu0 0.0
    %414 = vmatpush1.msra.mxu0 0.0
    %415 = vmatprep.subr.mxu0 0.0
    %416 = vmatpush1.msra.mxu0 0.0
    %417 = vmatprep.subr.mxu0 0.0
    %418 = vmatpush1.msra.mxu0 0.0
    %419 = vmatprep.subr.mxu0 0.0
    %420 = vmatpush1.msra.mxu0 0.0
    %421 = vmatprep.subr.mxu0 0.0
    %422 = vmatpush1.msra.mxu0 0.0
    %423 = vmatprep.mubr.f32.mxu0 0.0
    %424 = vmatmul.mubr.f32.gmra.mrb[0].mxu0 %v333
    %v425 = vpop.f32.mrb[0].mxu0
    %v426 = vadd.f32 %v330, %v425
    %v427 = vpop.f32.mrb[0].mxu0
    %428 = vmatprep.mubr.f32.mxu0 0.0
    %429 = vmatmul.mubr.f32.gmra.mrb[0].mxu0 %v336
    %v430 = vpop.f32.mrb[0].mxu0
    %v431 = vadd.f32 %v330, %v430
    %v432 = vpop.f32.mrb[0].mxu0
    %433 = vmatprep.mubr.f32.mxu0 0.0
    %434 = vmatmul.mubr.f32.gmra.mrb[0].mxu0 %v339
    %v435 = vpop.f32.mrb[0].mxu0
    %v436 = vadd.f32 %v330, %v435
    %v437 = vpop.f32.mrb[0].mxu0
    %438 = vmatprep.mubr.f32.mxu0 0.0
    %439 = vmatmul.mubr.f32.gmra.mrb[0].mxu0 %v342
    %v440 = vpop.f32.mrb[0].mxu0
    %v441 = vadd.f32 %v330, %v440
    %v442 = vpop.f32.mrb[0].mxu0
    %443 = vmatprep.mubr.f32.mxu0 0.0
    %444 = vmatmul.mubr.f32.gmra.mrb[0].mxu0 %v345
    %v445 = vpop.f32.mrb[0].mxu0
    %v446 = vadd.f32 %v330, %v445
    %v447 = vpop.f32.mrb[0].mxu0
    %448 = vmatprep.mubr.f32.mxu0 0.0
    %449 = vmatmul.mubr.f32.gmra.mrb[0].mxu0 %v348
    %v450 = vpop.f32.mrb[0].mxu0
    %v451 = vadd.f32 %v330, %v450
    %v452 = vpop.f32.mrb[0].mxu0
    %453 = vmatprep.mubr.f32.mxu0 0.0
    %454 = vmatmul.mubr.f32.gmra.mrb[0].mxu0 %v351
    %v455 = vpop.f32.mrb[0].mxu0
    %v456 = vadd.f32 %v330, %v455
    %v457 = vpop.f32.mrb[0].mxu0
    %458 = vmatprep.mubr.f32.mxu0 0.0
    %459 = vmatmul.mubr.f32.gmra.mrb[0].mxu0 %v354
    %v460 = vpop.f32.mrb[0].mxu0
    %v461 = vadd.f32 %v330, %v460
    %v462 = vpop.f32.mrb[0].mxu0
    %463 = vmatprep.mubr.f32.mxu0 0.0
    %464 = vmatmul.mubr.f32.gmra.mrb[0].mxu0 %v357
    %v465 = vpop.f32.mrb[0].mxu0
    %v466 = vadd.f32 %v330, %v465
    %v467 = vpop.f32.mrb[0].mxu0
    %468 = vdwg.mxu0
    %469 = vst [vmem:[#allocation4] sm:$0xff] %v426
    %470 = vst [vmem:[#allocation4 + $0x8] sm:$0xff] %v431
    %471 = vst [vmem:[#allocation4 + $0x10] sm:$0xff] %v436
    %472 = vst [vmem:[#allocation4 + $0x18] sm:$0xff] %v441
    %473 = vst [vmem:[#allocation4 + $0x20] sm:$0xff] %v446
    %474 = vst [vmem:[#allocation4 + $0x28] sm:$0xff] %v451
    %475 = vst [vmem:[#allocation4 + $0x30] sm:$0xff] %v456
    %476 = vst [vmem:[#allocation4 + $0x38] sm:$0xff] %v461
    %477 = vst [vmem:[#allocation4 + $0x40] sm:$0xff] %v466
    // Predicated region
    $region33: #{tpu_custom_call.1} parent=1 // pred_check
      _
    $region34: #{tpu_custom_call.1} parent=1 // pred_check_branch
      %479 = sbr.rel (0) target = $region36
    $region35: #{tpu_custom_call.1} parent=1 // pred_region
      %s481 = ssub.s32 1152, 1152
      %482 = vsyncadd [#allocation5], %s481
      %s483 = sshll.u32 [#allocation4], 4
      %s484 = int_to_ptr.vmem [resolvable:$true] %s483
      %489 = dma.vmem_to_hbm [thread:$0]  %s484, 1152, %s6, [#allocation5], 128, 128, 8
    $region36: #{tpu_custom_call.1} parent=1 // pred_fallthru
      _
    // Predicated region
    $region37: #{tpu_custom_call.1} parent=1 // pred_check
      _
    $region38: #{tpu_custom_call.1} parent=1 // pred_check_branch
      %491 = sbr.rel (0) target = $region40
    $region39: #{tpu_custom_call.1} parent=1 // pred_region
      %492 = dma.done [#allocation5], 1152
    $region40: #{tpu_custom_call.1} parent=1 // pred_fallthru
      _
    %493 = vsyncpa [#allocation5], 1

</llo_original>
